<compile_context>
chip_gen: v7x
topology: tpu7x:2x2x1
jax: 0.10.0
libtpu: 0.0.40
codegen_flags: <defaults>
</compile_context>

<pallas_src>
import jax
import jax.numpy as jnp
from jax.experimental import pallas as pl
from jax.experimental.pallas import tpu as pltpu

_MAX_DMA_CHUNKS = 8                  # max in-flight HBM->HBM DMAs
_MIN_BYTES_PER_CHUNK = 256 * 1024    # don't split below this many bytes/chunk


def _chunk_plan(shape, itemsize):
    """Static (start, size) slices along the leading axis for chunked DMA."""
    nbytes = itemsize
    for s in shape:
        nbytes *= s
    lead = shape[0] if len(shape) >= 1 else 1
    n_chunks = 1
    if lead >= 2 and nbytes >= 2 * _MIN_BYTES_PER_CHUNK:
        n_chunks = int(min(_MAX_DMA_CHUNKS, lead, nbytes // _MIN_BYTES_PER_CHUNK))
        n_chunks = max(1, n_chunks)
    base, rem = divmod(lead, n_chunks)
    chunks, start = [], 0
    for i in range(n_chunks):
        size = base + (1 if i < rem else 0)
        chunks.append((start, size))
        start += size
    return chunks, nbytes


def _dma_copy(x: jax.Array) -> jax.Array:
    """Fresh-buffer copy of `x` via direct HBM->HBM async DMA (no VMEM staging)."""
    chunks, nbytes = _chunk_plan(x.shape, jnp.dtype(x.dtype).itemsize)
    n_chunks = len(chunks)

    def kernel(x_ref, o_ref, sems):
        if n_chunks == 1:
            cp = pltpu.make_async_copy(x_ref, o_ref, sems.at[0])
            cp.start()
            cp.wait()
        else:
            descs = []
            for i, (s, sz) in enumerate(chunks):   # static Python loop
                d = pltpu.make_async_copy(
                    x_ref.at[pl.ds(s, sz)], o_ref.at[pl.ds(s, sz)], sems.at[i])
                d.start()
                descs.append(d)
            for d in descs:
                d.wait()

    # TODO(synk): on v7x a pl.core_map two-TC split of the chunk list could
    # drive both cores' DMA queues; single-core issue is kept for portability.
    return pl.pallas_call(
        kernel,
        out_shape=jax.ShapeDtypeStruct(x.shape, x.dtype),
        in_specs=[pl.BlockSpec(memory_space=pl.ANY)],
        out_specs=pl.BlockSpec(memory_space=pl.ANY),
        scratch_shapes=[pltpu.SemaphoreType.DMA((n_chunks,))],
        cost_estimate=pl.CostEstimate(
            flops=0, transcendentals=0, bytes_accessed=2 * nbytes),
    )(x)


def unsqueeze(x: jax.Array, dim: int, *, materialize: bool = False) -> jax.Array:
    """Pallas-backed equivalent of torch.Tensor.unsqueeze(dim).

    Default (materialize=False) is the zero-cost metadata-only path — the
    recommended production path.  materialize=True returns a fresh buffer
    produced by a Pallas HBM->HBM DMA copy kernel.
    """
    ndim = x.ndim
    if not (-(ndim + 1) <= dim <= ndim):
        raise ValueError(f"dim {dim} out of range for unsqueeze of rank {ndim}")
    if dim < 0:
        dim += ndim + 1

    y = jnp.expand_dims(x, dim)      # metadata-only, no HBM traffic
    if not materialize or x.size == 0 or x.ndim == 0:
        return y
    return _dma_copy(y)


if __name__ == "__main__":
    key = jax.random.PRNGKey(0)
    k0, k1 = jax.random.split(key)
    # Small NCHW-style input consistent with typical usage of the module.
    x = jax.random.normal(k0, (2, 4, 16, 16), dtype=jnp.float32)
    dim = 2  # the module's constructor parameter `dim`

    # Default metadata-only path (recommended).
    y = jax.block_until_ready(unsqueeze(x, dim))
    assert y.shape == (2, 4, 1, 16, 16), y.shape
    assert y.dtype == x.dtype
    assert bool(jnp.array_equal(y, jnp.expand_dims(x, dim)))

    # Materializing path: single HBM->HBM DMA through the Pallas kernel.
    y_mat = jax.block_until_ready(unsqueeze(x, dim, materialize=True))
    assert y_mat.shape == (2, 4, 1, 16, 16), y_mat.shape
    assert y_mat.dtype == x.dtype
    assert bool(jnp.array_equal(y_mat, jnp.expand_dims(x, dim)))

    # Negative dim (PyTorch allows), also through the Pallas DMA path.
    y_neg = jax.block_until_ready(unsqueeze(x, -1, materialize=True))
    assert y_neg.shape == (2, 4, 16, 16, 1), y_neg.shape
    assert bool(jnp.array_equal(y_neg, jnp.expand_dims(x, -1)))

    # Slightly larger input (~1 MiB) to exercise the multi-chunk DMA path.
    xl = jax.random.normal(k1, (64, 4, 32, 32), dtype=jnp.float32)
    yl = jax.block_until_ready(unsqueeze(xl, 2, materialize=True))
    assert yl.shape == (64, 4, 1, 32, 32), yl.shape
    assert bool(jnp.array_equal(yl, jnp.expand_dims(xl, 2)))

    print("KERNEL_OK")
</pallas_src>

<mosaic_0001>
module attributes {stable_mosaic.version = 11 : i64} {
  func.func @kernel(%arg0: memref<2x4x1x16x16xf32, #tpu.memory_space<any>>, %arg1: memref<2x4x1x16x16xf32, #tpu.memory_space<any>>, %arg2: memref<1x!tpu.dma_semaphore, #tpu.memory_space<semaphore_mem>>) attributes {dimension_semantics = [], scalar_prefetch = 0 : i64, scratch_operands = 1 : i64, tpu.core_type = #tpu.core_type<tc>} {
    %c0_i32 = arith.constant 0 : i32
    %0 = tpu.memref_slice %arg2[%c0_i32] : memref<1x!tpu.dma_semaphore, #tpu.memory_space<semaphore_mem>> -> memref<1x!tpu.dma_semaphore, #tpu.memory_space<semaphore_mem>>
    %1 = tpu.memref_squeeze %0 : memref<1x!tpu.dma_semaphore, #tpu.memory_space<semaphore_mem>> -> memref<!tpu.dma_semaphore, #tpu.memory_space<semaphore_mem>>
    tpu.enqueue_dma source(%arg0 : memref<2x4x1x16x16xf32, #tpu.memory_space<any>>) target(%arg1 : memref<2x4x1x16x16xf32, #tpu.memory_space<any>>) target_semaphore(%1 : memref<!tpu.dma_semaphore, #tpu.memory_space<semaphore_mem>>)
    %c0_i32_0 = arith.constant 0 : i32
    %2 = tpu.memref_slice %arg2[%c0_i32_0] : memref<1x!tpu.dma_semaphore, #tpu.memory_space<semaphore_mem>> -> memref<1x!tpu.dma_semaphore, #tpu.memory_space<semaphore_mem>>
    %3 = tpu.memref_squeeze %2 : memref<1x!tpu.dma_semaphore, #tpu.memory_space<semaphore_mem>> -> memref<!tpu.dma_semaphore, #tpu.memory_space<semaphore_mem>>
    tpu.wait_dma2 semaphore(%3 : memref<!tpu.dma_semaphore, #tpu.memory_space<semaphore_mem>>) src(%arg0 : memref<2x4x1x16x16xf32, #tpu.memory_space<any>>) dst(%arg1 : memref<2x4x1x16x16xf32, #tpu.memory_space<any>>)
    return
  }
}

</mosaic_0001>

<llo_original>
// kernel: tpu_custom_call.1
$region0: #{tpu_custom_call.1}
  #allocation0 [shape = 'u32[]', space=smem, size = 0x4, offset = 0x4, fixed_abs, tag = 'smem constant byte address 0x4 - core index']
  #allocation1 [shape = 'u32[144,128]{1,0:T(1,128)}', space=vmem, size = 0x12000, scoped, tag = 'internal scratch']
  #allocation2 [shape = 's32[1]{0}', space=sflag, size = 0x4, scoped, tag = 'scratch operand']
  #allocation3 [shape = 's32[]', space=sflag, size = 0x4, offset = 0, fixed_abs, tag = 'sflag constant byte address 0x0 - dummy sync flag']
  #allocation4 [shape = 'u32[0]{0}', space=smem, size = 0, offset = 0, fixed_abs, tag = 'smem constant byte address 0x0 - null']
  %s0 = inlined_call_operand.hbm [shape: f32[2,4,1,16,16], index: 0, kind: input, shape index: {}]
  %s1 = inlined_call_operand.hbm [shape: f32[2,4,1,16,16], index: 1, kind: output, shape index: {}]
  %s2 = sld [smem:[#allocation0]]
  $region2: #{tpu_custom_call.1} parent=0
    _
  %s4 = ssub.s32 1, %s2
  %s5 = scalar_select 0, %s4, %s2
  %s7 = sshll.u32 1, 14
  %s8 = sxor.u32 4294967295, %s7
  %s11 = sshll.u32 3, 24
  %s12 = sxor.u32 4294967295, %s11
  %s13 = sand.u32 0, %s12
  %s15 = sor.u32 %s13, 0
  %18 = dma.general %s0, 2048, %s1, [#allocation2], [#allocation3], [#allocation4], %s15, 0
  %s19 = smul.u32 2, 4
  %s20 = smul.u32 %s19, 1
  %s21 = smul.u32 %s20, 16
  %s22 = smul.u32 %s21, 1
  %s23 = sshll.u32 %s22, 4
  %24 = dma.done [#allocation2], %s23
  %25 = vsyncmov [#allocation2]
  %s26 = vpop.sfrf %25
  %p27 = scmp.eq.s32.totalorder %s26, 0
  %p28 = pneg %p27
  %30 = shalt.err (%p28)

</llo_original>
